<compile_context>
chip_gen: v5e
topology: v5e:2x2
jax: 0.10.0
libtpu: 0.0.40
codegen_flags: <defaults>
</compile_context>

<pallas_src>
import jax
import jax.numpy as jnp
from jax.experimental import pallas as pl
from jax.experimental.pallas import tpu as pltpu

_WIDTH = 512                 # last dim: multiple of 128 -> lane-dense
_BLOCK_ROWS = 256            # 256 x 512 f32 = 512 KiB per tile
_BLOCK_ELEMS = _BLOCK_ROWS * _WIDTH
_PALLAS_MIN_N = 1024         # below this, plain JAX fused mul-add wins


def linear_kernel(x_ref, w_ref, b_ref, o_ref):
    # Linear(1, 1) is exactly an elementwise scale + shift: y = x * W + b.
    # Scalar reads from SMEM go down the scalar path and broadcast for free
    # on the VPU; the op is pure HBM-bandwidth bound.
    w = w_ref[0, 0]
    b = b_ref[0, 0]
    o_ref[...] = (x_ref[...] * w + b).astype(o_ref.dtype)


def _linear_pallas(x_flat, weight, bias):
    n = x_flat.shape[0]
    padded = pl.cdiv(n, _BLOCK_ELEMS) * _BLOCK_ELEMS   # static python int
    x_pad = jnp.pad(x_flat, (0, padded - n))
    rows = padded // _WIDTH
    x2d = x_pad.reshape(rows, _WIDTH)

    out2d = pl.pallas_call(
        linear_kernel,
        out_shape=jax.ShapeDtypeStruct((rows, _WIDTH), x_flat.dtype),
        grid=(rows // _BLOCK_ROWS,),
        in_specs=[
            pl.BlockSpec((_BLOCK_ROWS, _WIDTH), lambda i: (i, 0)),
            # Scalar weight / bias live in SMEM: no (8,128)-padded VMEM tile,
            # no vector load + lane extract, no per-block double-buffered DMA.
            pl.BlockSpec(memory_space=pltpu.MemorySpace.SMEM),
            pl.BlockSpec(memory_space=pltpu.MemorySpace.SMEM),
        ],
        out_specs=pl.BlockSpec((_BLOCK_ROWS, _WIDTH), lambda i: (i, 0)),
        compiler_params=pltpu.CompilerParams(
            # Batch axis is embarrassingly parallel -> megacore sharding (v7x).
            dimension_semantics=("parallel",),
        ),
    )(x2d, weight, bias)

    # Drop the lane-dense padding and restore the flat view.
    return out2d.reshape(padded)[:n]


def linear_model(x, weight, bias):
    """x: (N, 1) f32; weight: (1, 1); bias: (1, 1). Returns (N, 1) = x*W + b."""
    N, F = x.shape
    assert F == 1 and weight.shape == (1, 1) and bias.shape == (1, 1)
    if N < _PALLAS_MIN_N:
        # Kernel launch + DMA setup dwarfs a handful of FMAs at tiny sizes.
        return x * weight[0, 0] + bias[0, 0]
    return _linear_pallas(x.reshape(-1), weight, bias).reshape(N, 1)


if __name__ == "__main__":
    key = jax.random.PRNGKey(0)
    kx, kw, kb = jax.random.split(key, 3)

    # torch.nn.Linear(1, 1) init: uniform(-1/sqrt(in), +1/sqrt(in)) = U(-1, 1).
    weight = jax.random.uniform(kw, (1, 1), jnp.float32, minval=-1.0, maxval=1.0)
    bias = jax.random.uniform(kb, (1, 1), jnp.float32, minval=-1.0, maxval=1.0)

    # Large enough to take the Pallas path and exercise pad/slice handling
    # (5000 is not a multiple of the 512-wide lane-dense tile), tiny overall.
    N = 5000
    x = jax.random.normal(kx, (N, 1), jnp.float32)

    y = jax.block_until_ready(linear_model(x, weight, bias))
    y_ref = x * weight[0, 0] + bias[0, 0]
    assert y.shape == (N, 1)
    assert jnp.allclose(y, y_ref, atol=1e-6), "pallas path mismatch vs reference"

    # Small-batch fast path keeps identical Linear(1,1) semantics.
    x_small = jax.random.normal(kx, (8, 1), jnp.float32)
    y_small = jax.block_until_ready(linear_model(x_small, weight, bias))
    assert jnp.allclose(y_small, x_small * weight[0, 0] + bias[0, 0], atol=1e-6)

    print("KERNEL_OK")
</pallas_src>

<mosaic_0001>
module attributes {stable_mosaic.version = 11 : i64} {
  func.func @linear_kernel(%arg0: i32, %arg1: memref<256x512xf32, #tpu.memory_space<vmem>>, %arg2: memref<1x1xf32, #tpu.memory_space<smem>>, %arg3: memref<1x1xf32, #tpu.memory_space<smem>>, %arg4: memref<256x512xf32, #tpu.memory_space<vmem>>) attributes {dimension_semantics = [#tpu.dimension_semantics<parallel>], iteration_bounds = array<i64: 1>, scalar_prefetch = 0 : i64, scratch_operands = 0 : i64, tpu.core_type = #tpu.core_type<tc>, window_params = [{transform_indices = @transform_0, window_bounds = array<i64: 256, 512>}, {transform_indices = @transform_1, window_bounds = array<i64: 1, 1>}, {transform_indices = @transform_2, window_bounds = array<i64: 1, 1>}, {transform_indices = @transform_3, window_bounds = array<i64: 256, 512>}]} {
    %c0 = arith.constant 0 : index
    %c0_0 = arith.constant 0 : index
    %0 = memref.load %arg2[%c0, %c0_0] : memref<1x1xf32, #tpu.memory_space<smem>>
    %c0_1 = arith.constant 0 : index
    %c0_2 = arith.constant 0 : index
    %1 = memref.load %arg3[%c0_1, %c0_2] : memref<1x1xf32, #tpu.memory_space<smem>>
    %c0_3 = arith.constant 0 : index
    %c0_4 = arith.constant 0 : index
    %2 = vector.load %arg1[%c0_3, %c0_4] : memref<256x512xf32, #tpu.memory_space<vmem>>, vector<256x512xf32>
    %3 = vector.broadcast %0 : f32 to vector<256x512xf32>
    %4 = arith.mulf %2, %3 : vector<256x512xf32>
    %5 = vector.broadcast %1 : f32 to vector<256x512xf32>
    %6 = arith.addf %4, %5 : vector<256x512xf32>
    %c0_5 = arith.constant 0 : index
    %c0_6 = arith.constant 0 : index
    %7 = vector.load %arg4[%c0_5, %c0_6] : memref<256x512xf32, #tpu.memory_space<vmem>>, vector<256x512xf32>
    tpu.vector_store %arg4[%c0_5, %c0_6], %6 {strides = array<i32>} : memref<256x512xf32, #tpu.memory_space<vmem>>, vector<256x512xf32>,
    return
  }
  func.func @transform_0(%arg0: i32) -> (i32, i32) {
    %c0_i32 = arith.constant 0 : i32
    %c0_i32_0 = arith.constant 0 : i32
    return %arg0, %c0_i32 : i32, i32
  }
  func.func @transform_1(%arg0: i32) -> (i32, i32) {
    %c0_i32 = arith.constant 0 : i32
    %c0_i32_0 = arith.constant 0 : i32
    %c0_i32_1 = arith.constant 0 : i32
    return %c0_i32, %c0_i32_0 : i32, i32
  }
  func.func @transform_2(%arg0: i32) -> (i32, i32) {
    %c0_i32 = arith.constant 0 : i32
    %c0_i32_0 = arith.constant 0 : i32
    %c0_i32_1 = arith.constant 0 : i32
    return %c0_i32, %c0_i32_0 : i32, i32
  }
  func.func @transform_3(%arg0: i32) -> (i32, i32) {
    %c0_i32 = arith.constant 0 : i32
    %c0_i32_0 = arith.constant 0 : i32
    return %arg0, %c0_i32 : i32, i32
  }
}

</mosaic_0001>

<llo_original>
// kernel: tpu_custom_call.1
$region0: #{tpu_custom_call.1}
  #allocation0 [shape = 'u32[]', space=smem, size = 0x4, offset = 0x4, fixed_abs, tag = 'smem constant byte address 0x4 - core index']
  #allocation1 [shape = 'u32[72,128]{1,0:T(1,128)}', space=vmem, size = 0x9000, scoped, tag = 'internal scratch']
  #allocation2 [shape = 'f32[1,1]{1,0:T(1,128)S(6)}', space=smem, size = 0x200, scoped, tag = 'scoped memory for tpu_custom_call.1']
  #allocation3 [shape = 'f32[1,1]{1,0:T(1,128)S(6)}', space=smem, size = 0x200, scoped, tag = 'scoped memory for tpu_custom_call.1']
  %s0 = inlined_call_operand.hbm [shape: f32[256,512], index: 0, kind: input, shape index: {}]
  %s1 = inlined_call_operand.<no memory space> [shape: f32[1,1], index: 1, kind: input, shape index: {}]
  %s2 = inlined_call_operand.<no memory space> [shape: f32[1,1], index: 2, kind: input, shape index: {}]
  %s3 = inlined_call_operand.hbm [shape: f32[256,512], index: 3, kind: output, shape index: {}]
  %s4 = sld [smem:[#allocation0]]
  $region26: #{tpu_custom_call.1} parent=0
    _
  %s6 = ssub.s32 1, %s4
  %s7 = scalar_select 0, %s6, %s4
  %8 = sst [smem:[#allocation2]] %s1
  %9 = sst [smem:[#allocation3]] %s2
  $region1: #{tpu_custom_call.1} parent=0
    #allocation4 [shape = 'u8[524288]{0}', space=vmem, size = 0x80000, scoped, tag = 'input window, operand 0, single buffered']
    #allocation5 [shape = 's32[1]{0}', space=sflag, size = 0x4, scoped, tag = 'scoped memory for tpu_custom_call.1']
    #allocation6 [shape = 's32[1]{0}', space=sflag, size = 0x4, scoped, tag = 'scoped memory for tpu_custom_call.1']
    #allocation7 [shape = 'u8[524288]{0}', space=vmem, size = 0x80000, scoped, tag = 'output window, operand 0, single buffered']
    %10 = vsyncpa [#allocation5], 0
    %11 = vsyncpa [#allocation6], 0
    // Predicated region
    $region2: #{tpu_custom_call.1} parent=1 // pred_check
      _
    $region3: #{tpu_custom_call.1} parent=1 // pred_check_branch
      %13 = sbr.rel (0) target = $region5
    $region4: #{tpu_custom_call.1} parent=1 // pred_region
      %15 = vsyncadd [#allocation5], 0
      %s16 = sshll.u32 %s0, 4
      %s17 = int_to_ptr.hbm [resolvable:$true] %s16
      %s18 = sshll.u32 [#allocation4], 4
      %s19 = int_to_ptr.vmem [resolvable:$true] %s18
      %24 = dma.hbm_to_vmem [thread:$0]  %s17, 16384, %s19, [#allocation5], 512, 512, 32
    $region5: #{tpu_custom_call.1} parent=1 // pred_fallthru
      _
    // Predicated region
    $region6: #{tpu_custom_call.1} parent=1 // pred_check
      _
    $region7: #{tpu_custom_call.1} parent=1 // pred_check_branch
      %26 = sbr.rel (0) target = $region9
    $region8: #{tpu_custom_call.1} parent=1 // pred_region
      _
    $region9: #{tpu_custom_call.1} parent=1 // pred_fallthru
      _
    // Predicated region
    $region10: #{tpu_custom_call.1} parent=1 // pred_check
      _
    $region11: #{tpu_custom_call.1} parent=1 // pred_check_branch
      %28 = sbr.rel (0) target = $region13
    $region12: #{tpu_custom_call.1} parent=1 // pred_region
      _
    $region13: #{tpu_custom_call.1} parent=1 // pred_fallthru
      _
    // Predicated region
    $region14: #{tpu_custom_call.1} parent=1 // pred_check
      _
    $region15: #{tpu_custom_call.1} parent=1 // pred_check_branch
      %30 = sbr.rel (0) target = $region17
    $region16: #{tpu_custom_call.1} parent=1 // pred_region
      %32 = dma.done [#allocation5], 16384
    $region17: #{tpu_custom_call.1} parent=1 // pred_fallthru
      _
    %s33 = sld [smem:[#allocation2]]
    %s34 = sld [smem:[#allocation3]]
    %v35 = vld [vmem:[#allocation4] sm:$0xff]
    %v36 = vld [vmem:[#allocation4 + $0x8] sm:$0xff]
    %v37 = vld [vmem:[#allocation4 + $0x10] sm:$0xff]
    %v38 = vld [vmem:[#allocation4 + $0x18] sm:$0xff]
    %v39 = vld [vmem:[#allocation4 + $0x20] sm:$0xff]
    %v40 = vld [vmem:[#allocation4 + $0x28] sm:$0xff]
    %v41 = vld [vmem:[#allocation4 + $0x30] sm:$0xff]
    %v42 = vld [vmem:[#allocation4 + $0x38] sm:$0xff]
    %v43 = vld [vmem:[#allocation4 + $0x40] sm:$0xff]
    %v44 = vld [vmem:[#allocation4 + $0x48] sm:$0xff]
    %v45 = vld [vmem:[#allocation4 + $0x50] sm:$0xff]
    %v46 = vld [vmem:[#allocation4 + $0x58] sm:$0xff]
    %v47 = vld [vmem:[#allocation4 + $0x60] sm:$0xff]
    %v48 = vld [vmem:[#allocation4 + $0x68] sm:$0xff]
    %v49 = vld [vmem:[#allocation4 + $0x70] sm:$0xff]
    %v50 = vld [vmem:[#allocation4 + $0x78] sm:$0xff]
    %v51 = vld [vmem:[#allocation4 + $0x80] sm:$0xff]
    %v52 = vld [vmem:[#allocation4 + $0x88] sm:$0xff]
    %v53 = vld [vmem:[#allocation4 + $0x90] sm:$0xff]
    %v54 = vld [vmem:[#allocation4 + $0x98] sm:$0xff]
    %v55 = vld [vmem:[#allocation4 + $0xa0] sm:$0xff]
    %v56 = vld [vmem:[#allocation4 + $0xa8] sm:$0xff]
    %v57 = vld [vmem:[#allocation4 + $0xb0] sm:$0xff]
    %v58 = vld [vmem:[#allocation4 + $0xb8] sm:$0xff]
    %v59 = vld [vmem:[#allocation4 + $0xc0] sm:$0xff]
    %v60 = vld [vmem:[#allocation4 + $0xc8] sm:$0xff]
    %v61 = vld [vmem:[#allocation4 + $0xd0] sm:$0xff]
    %v62 = vld [vmem:[#allocation4 + $0xd8] sm:$0xff]
    %v63 = vld [vmem:[#allocation4 + $0xe0] sm:$0xff]
    %v64 = vld [vmem:[#allocation4 + $0xe8] sm:$0xff]
    %v65 = vld [vmem:[#allocation4 + $0xf0] sm:$0xff]
    %v66 = vld [vmem:[#allocation4 + $0xf8] sm:$0xff]
    %v67 = vld [vmem:[#allocation4 + $0x100] sm:$0xff]
    %v68 = vld [vmem:[#allocation4 + $0x108] sm:$0xff]
    %v69 = vld [vmem:[#allocation4 + $0x110] sm:$0xff]
    %v70 = vld [vmem:[#allocation4 + $0x118] sm:$0xff]
    %v71 = vld [vmem:[#allocation4 + $0x120] sm:$0xff]
    %v72 = vld [vmem:[#allocation4 + $0x128] sm:$0xff]
    %v73 = vld [vmem:[#allocation4 + $0x130] sm:$0xff]
    %v74 = vld [vmem:[#allocation4 + $0x138] sm:$0xff]
    %v75 = vld [vmem:[#allocation4 + $0x140] sm:$0xff]
    %v76 = vld [vmem:[#allocation4 + $0x148] sm:$0xff]
    %v77 = vld [vmem:[#allocation4 + $0x150] sm:$0xff]
    %v78 = vld [vmem:[#allocation4 + $0x158] sm:$0xff]
    %v79 = vld [vmem:[#allocation4 + $0x160] sm:$0xff]
    %v80 = vld [vmem:[#allocation4 + $0x168] sm:$0xff]
    %v81 = vld [vmem:[#allocation4 + $0x170] sm:$0xff]
    %v82 = vld [vmem:[#allocation4 + $0x178] sm:$0xff]
    %v83 = vld [vmem:[#allocation4 + $0x180] sm:$0xff]
    %v84 = vld [vmem:[#allocation4 + $0x188] sm:$0xff]
    %v85 = vld [vmem:[#allocation4 + $0x190] sm:$0xff]
    %v86 = vld [vmem:[#allocation4 + $0x198] sm:$0xff]
    %v87 = vld [vmem:[#allocation4 + $0x1a0] sm:$0xff]
    %v88 = vld [vmem:[#allocation4 + $0x1a8] sm:$0xff]
    %v89 = vld [vmem:[#allocation4 + $0x1b0] sm:$0xff]
    %v90 = vld [vmem:[#allocation4 + $0x1b8] sm:$0xff]
    %v91 = vld [vmem:[#allocation4 + $0x1c0] sm:$0xff]
    %v92 = vld [vmem:[#allocation4 + $0x1c8] sm:$0xff]
    %v93 = vld [vmem:[#allocation4 + $0x1d0] sm:$0xff]
    %v94 = vld [vmem:[#allocation4 + $0x1d8] sm:$0xff]
    %v95 = vld [vmem:[#allocation4 + $0x1e0] sm:$0xff]
    %v96 = vld [vmem:[#allocation4 + $0x1e8] sm:$0xff]
    %v97 = vld [vmem:[#allocation4 + $0x1f0] sm:$0xff]
    %v98 = vld [vmem:[#allocation4 + $0x1f8] sm:$0xff]
    %v99 = vld [vmem:[#allocation4 + $0x200] sm:$0xff]
    %v100 = vld [vmem:[#allocation4 + $0x208] sm:$0xff]
    %v101 = vld [vmem:[#allocation4 + $0x210] sm:$0xff]
    %v102 = vld [vmem:[#allocation4 + $0x218] sm:$0xff]
    %v103 = vld [vmem:[#allocation4 + $0x220] sm:$0xff]
    %v104 = vld [vmem:[#allocation4 + $0x228] sm:$0xff]
    %v105 = vld [vmem:[#allocation4 + $0x230] sm:$0xff]
    %v106 = vld [vmem:[#allocation4 + $0x238] sm:$0xff]
    %v107 = vld [vmem:[#allocation4 + $0x240] sm:$0xff]
    %v108 = vld [vmem:[#allocation4 + $0x248] sm:$0xff]
    %v109 = vld [vmem:[#allocation4 + $0x250] sm:$0xff]
    %v110 = vld [vmem:[#allocation4 + $0x258] sm:$0xff]
    %v111 = vld [vmem:[#allocation4 + $0x260] sm:$0xff]
    %v112 = vld [vmem:[#allocation4 + $0x268] sm:$0xff]
    %v113 = vld [vmem:[#allocation4 + $0x270] sm:$0xff]
    %v114 = vld [vmem:[#allocation4 + $0x278] sm:$0xff]
    %v115 = vld [vmem:[#allocation4 + $0x280] sm:$0xff]
    %v116 = vld [vmem:[#allocation4 + $0x288] sm:$0xff]
    %v117 = vld [vmem:[#allocation4 + $0x290] sm:$0xff]
    %v118 = vld [vmem:[#allocation4 + $0x298] sm:$0xff]
    %v119 = vld [vmem:[#allocation4 + $0x2a0] sm:$0xff]
    %v120 = vld [vmem:[#allocation4 + $0x2a8] sm:$0xff]
    %v121 = vld [vmem:[#allocation4 + $0x2b0] sm:$0xff]
    %v122 = vld [vmem:[#allocation4 + $0x2b8] sm:$0xff]
    %v123 = vld [vmem:[#allocation4 + $0x2c0] sm:$0xff]
    %v124 = vld [vmem:[#allocation4 + $0x2c8] sm:$0xff]
    %v125 = vld [vmem:[#allocation4 + $0x2d0] sm:$0xff]
    %v126 = vld [vmem:[#allocation4 + $0x2d8] sm:$0xff]
    %v127 = vld [vmem:[#allocation4 + $0x2e0] sm:$0xff]
    %v128 = vld [vmem:[#allocation4 + $0x2e8] sm:$0xff]
    %v129 = vld [vmem:[#allocation4 + $0x2f0] sm:$0xff]
    %v130 = vld [vmem:[#allocation4 + $0x2f8] sm:$0xff]
    %v131 = vld [vmem:[#allocation4 + $0x300] sm:$0xff]
    %v132 = vld [vmem:[#allocation4 + $0x308] sm:$0xff]
    %v133 = vld [vmem:[#allocation4 + $0x310] sm:$0xff]
    %v134 = vld [vmem:[#allocation4 + $0x318] sm:$0xff]
    %v135 = vld [vmem:[#allocation4 + $0x320] sm:$0xff]
    %v136 = vld [vmem:[#allocation4 + $0x328] sm:$0xff]
    %v137 = vld [vmem:[#allocation4 + $0x330] sm:$0xff]
    %v138 = vld [vmem:[#allocation4 + $0x338] sm:$0xff]
    %v139 = vld [vmem:[#allocation4 + $0x340] sm:$0xff]
    %v140 = vld [vmem:[#allocation4 + $0x348] sm:$0xff]
    %v141 = vld [vmem:[#allocation4 + $0x350] sm:$0xff]
    %v142 = vld [vmem:[#allocation4 + $0x358] sm:$0xff]
    %v143 = vld [vmem:[#allocation4 + $0x360] sm:$0xff]
    %v144 = vld [vmem:[#allocation4 + $0x368] sm:$0xff]
    %v145 = vld [vmem:[#allocation4 + $0x370] sm:$0xff]
    %v146 = vld [vmem:[#allocation4 + $0x378] sm:$0xff]
    %v147 = vld [vmem:[#allocation4 + $0x380] sm:$0xff]
    %v148 = vld [vmem:[#allocation4 + $0x388] sm:$0xff]
    %v149 = vld [vmem:[#allocation4 + $0x390] sm:$0xff]
    %v150 = vld [vmem:[#allocation4 + $0x398] sm:$0xff]
    %v151 = vld [vmem:[#allocation4 + $0x3a0] sm:$0xff]
    %v152 = vld [vmem:[#allocation4 + $0x3a8] sm:$0xff]
    %v153 = vld [vmem:[#allocation4 + $0x3b0] sm:$0xff]
    %v154 = vld [vmem:[#allocation4 + $0x3b8] sm:$0xff]
    %v155 = vld [vmem:[#allocation4 + $0x3c0] sm:$0xff]
    %v156 = vld [vmem:[#allocation4 + $0x3c8] sm:$0xff]
    %v157 = vld [vmem:[#allocation4 + $0x3d0] sm:$0xff]
    %v158 = vld [vmem:[#allocation4 + $0x3d8] sm:$0xff]
    %v159 = vld [vmem:[#allocation4 + $0x3e0] sm:$0xff]
    %v160 = vld [vmem:[#allocation4 + $0x3e8] sm:$0xff]
    %v161 = vld [vmem:[#allocation4 + $0x3f0] sm:$0xff]
    %v162 = vld [vmem:[#allocation4 + $0x3f8] sm:$0xff]
    %v163 = vstv %s33
    %v164 = vmul.f32 %v35, %v163
    %v165 = vmul.f32 %v36, %v163
    %v166 = vmul.f32 %v37, %v163
    %v167 = vmul.f32 %v38, %v163
    %v168 = vmul.f32 %v39, %v163
    %v169 = vmul.f32 %v40, %v163
    %v170 = vmul.f32 %v41, %v163
    %v171 = vmul.f32 %v42, %v163
    %v172 = vmul.f32 %v43, %v163
    %v173 = vmul.f32 %v44, %v163
    %v174 = vmul.f32 %v45, %v163
    %v175 = vmul.f32 %v46, %v163
    %v176 = vmul.f32 %v47, %v163
    %v177 = vmul.f32 %v48, %v163
    %v178 = vmul.f32 %v49, %v163
    %v179 = vmul.f32 %v50, %v163
    %v180 = vmul.f32 %v51, %v163
    %v181 = vmul.f32 %v52, %v163
    %v182 = vmul.f32 %v53, %v163
    %v183 = vmul.f32 %v54, %v163
    %v184 = vmul.f32 %v55, %v163
    %v185 = vmul.f32 %v56, %v163
    %v186 = vmul.f32 %v57, %v163
    %v187 = vmul.f32 %v58, %v163
    %v188 = vmul.f32 %v59, %v163
    %v189 = vmul.f32 %v60, %v163
    %v190 = vmul.f32 %v61, %v163
    %v191 = vmul.f32 %v62, %v163
    %v192 = vmul.f32 %v63, %v163
    %v193 = vmul.f32 %v64, %v163
    %v194 = vmul.f32 %v65, %v163
    %v195 = vmul.f32 %v66, %v163
    %v196 = vmul.f32 %v67, %v163
    %v197 = vmul.f32 %v68, %v163
    %v198 = vmul.f32 %v69, %v163
    %v199 = vmul.f32 %v70, %v163
    %v200 = vmul.f32 %v71, %v163
    %v201 = vmul.f32 %v72, %v163
    %v202 = vmul.f32 %v73, %v163
    %v203 = vmul.f32 %v74, %v163
    %v204 = vmul.f32 %v75, %v163
    %v205 = vmul.f32 %v76, %v163
    %v206 = vmul.f32 %v77, %v163
    %v207 = vmul.f32 %v78, %v163
    %v208 = vmul.f32 %v79, %v163
    %v209 = vmul.f32 %v80, %v163
    %v210 = vmul.f32 %v81, %v163
    %v211 = vmul.f32 %v82, %v163
    %v212 = vmul.f32 %v83, %v163
    %v213 = vmul.f32 %v84, %v163
    %v214 = vmul.f32 %v85, %v163
    %v215 = vmul.f32 %v86, %v163
    %v216 = vmul.f32 %v87, %v163
    %v217 = vmul.f32 %v88, %v163
    %v218 = vmul.f32 %v89, %v163
    %v219 = vmul.f32 %v90, %v163
    %v220 = vmul.f32 %v91, %v163
    %v221 = vmul.f32 %v92, %v163
    %v222 = vmul.f32 %v93, %v163
    %v223 = vmul.f32 %v94, %v163
    %v224 = vmul.f32 %v95, %v163
    %v225 = vmul.f32 %v96, %v163
    %v226 = vmul.f32 %v97, %v163
    %v227 = vmul.f32 %v98, %v163
    %v228 = vmul.f32 %v99, %v163
    %v229 = vmul.f32 %v100, %v163
    %v230 = vmul.f32 %v101, %v163
    %v231 = vmul.f32 %v102, %v163
    %v232 = vmul.f32 %v103, %v163
    %v233 = vmul.f32 %v104, %v163
    %v234 = vmul.f32 %v105, %v163
    %v235 = vmul.f32 %v106, %v163
    %v236 = vmul.f32 %v107, %v163
    %v237 = vmul.f32 %v108, %v163
    %v238 = vmul.f32 %v109, %v163
    %v239 = vmul.f32 %v110, %v163
    %v240 = vmul.f32 %v111, %v163
    %v241 = vmul.f32 %v112, %v163
    %v242 = vmul.f32 %v113, %v163
    %v243 = vmul.f32 %v114, %v163
    %v244 = vmul.f32 %v115, %v163
    %v245 = vmul.f32 %v116, %v163
    %v246 = vmul.f32 %v117, %v163
    %v247 = vmul.f32 %v118, %v163
    %v248 = vmul.f32 %v119, %v163
    %v249 = vmul.f32 %v120, %v163
    %v250 = vmul.f32 %v121, %v163
    %v251 = vmul.f32 %v122, %v163
    %v252 = vmul.f32 %v123, %v163
    %v253 = vmul.f32 %v124, %v163
    %v254 = vmul.f32 %v125, %v163
    %v255 = vmul.f32 %v126, %v163
    %v256 = vmul.f32 %v127, %v163
    %v257 = vmul.f32 %v128, %v163
    %v258 = vmul.f32 %v129, %v163
    %v259 = vmul.f32 %v130, %v163
    %v260 = vmul.f32 %v131, %v163
    %v261 = vmul.f32 %v132, %v163
    %v262 = vmul.f32 %v133, %v163
    %v263 = vmul.f32 %v134, %v163
    %v264 = vmul.f32 %v135, %v163
    %v265 = vmul.f32 %v136, %v163
    %v266 = vmul.f32 %v137, %v163
    %v267 = vmul.f32 %v138, %v163
    %v268 = vmul.f32 %v139, %v163
    %v269 = vmul.f32 %v140, %v163
    %v270 = vmul.f32 %v141, %v163
    %v271 = vmul.f32 %v142, %v163
    %v272 = vmul.f32 %v143, %v163
    %v273 = vmul.f32 %v144, %v163
    %v274 = vmul.f32 %v145, %v163
    %v275 = vmul.f32 %v146, %v163
    %v276 = vmul.f32 %v147, %v163
    %v277 = vmul.f32 %v148, %v163
    %v278 = vmul.f32 %v149, %v163
    %v279 = vmul.f32 %v150, %v163
    %v280 = vmul.f32 %v151, %v163
    %v281 = vmul.f32 %v152, %v163
    %v282 = vmul.f32 %v153, %v163
    %v283 = vmul.f32 %v154, %v163
    %v284 = vmul.f32 %v155, %v163
    %v285 = vmul.f32 %v156, %v163
    %v286 = vmul.f32 %v157, %v163
    %v287 = vmul.f32 %v158, %v163
    %v288 = vmul.f32 %v159, %v163
    %v289 = vmul.f32 %v160, %v163
    %v290 = vmul.f32 %v161, %v163
    %v291 = vmul.f32 %v162, %v163
    %v292 = vstv %s34
    %v293 = vadd.f32 %v164, %v292
    %v294 = vadd.f32 %v165, %v292
    %v295 = vadd.f32 %v166, %v292
    %v296 = vadd.f32 %v167, %v292
    %v297 = vadd.f32 %v168, %v292
    %v298 = vadd.f32 %v169, %v292
    %v299 = vadd.f32 %v170, %v292
    %v300 = vadd.f32 %v171, %v292
    %v301 = vadd.f32 %v172, %v292
    %v302 = vadd.f32 %v173, %v292
    %v303 = vadd.f32 %v174, %v292
    %v304 = vadd.f32 %v175, %v292
    %v305 = vadd.f32 %v176, %v292
    %v306 = vadd.f32 %v177, %v292
    %v307 = vadd.f32 %v178, %v292
    %v308 = vadd.f32 %v179, %v292
    %v309 = vadd.f32 %v180, %v292
    %v310 = vadd.f32 %v181, %v292
    %v311 = vadd.f32 %v182, %v292
    %v312 = vadd.f32 %v183, %v292
    %v313 = vadd.f32 %v184, %v292
    %v314 = vadd.f32 %v185, %v292
    %v315 = vadd.f32 %v186, %v292
    %v316 = vadd.f32 %v187, %v292
    %v317 = vadd.f32 %v188, %v292
    %v318 = vadd.f32 %v189, %v292
    %v319 = vadd.f32 %v190, %v292
    %v320 = vadd.f32 %v191, %v292
    %v321 = vadd.f32 %v192, %v292
    %v322 = vadd.f32 %v193, %v292
    %v323 = vadd.f32 %v194, %v292
    %v324 = vadd.f32 %v195, %v292
    %v325 = vadd.f32 %v196, %v292
    %v326 = vadd.f32 %v197, %v292
    %v327 = vadd.f32 %v198, %v292
    %v328 = vadd.f32 %v199, %v292
    %v329 = vadd.f32 %v200, %v292
    %v330 = vadd.f32 %v201, %v292
    %v331 = vadd.f32 %v202, %v292
    %v332 = vadd.f32 %v203, %v292
    %v333 = vadd.f32 %v204, %v292
    %v334 = vadd.f32 %v205, %v292
    %v335 = vadd.f32 %v206, %v292
    %v336 = vadd.f32 %v207, %v292
    %v337 = vadd.f32 %v208, %v292
    %v338 = vadd.f32 %v209, %v292
    %v339 = vadd.f32 %v210, %v292
    %v340 = vadd.f32 %v211, %v292
    %v341 = vadd.f32 %v212, %v292
    %v342 = vadd.f32 %v213, %v292
    %v343 = vadd.f32 %v214, %v292
    %v344 = vadd.f32 %v215, %v292
    %v345 = vadd.f32 %v216, %v292
    %v346 = vadd.f32 %v217, %v292
    %v347 = vadd.f32 %v218, %v292
    %v348 = vadd.f32 %v219, %v292
    %v349 = vadd.f32 %v220, %v292
    %v350 = vadd.f32 %v221, %v292
    %v351 = vadd.f32 %v222, %v292
    %v352 = vadd.f32 %v223, %v292
    %v353 = vadd.f32 %v224, %v292
    %v354 = vadd.f32 %v225, %v292
    %v355 = vadd.f32 %v226, %v292
    %v356 = vadd.f32 %v227, %v292
    %v357 = vadd.f32 %v228, %v292
    %v358 = vadd.f32 %v229, %v292
    %v359 = vadd.f32 %v230, %v292
    %v360 = vadd.f32 %v231, %v292
    %v361 = vadd.f32 %v232, %v292
    %v362 = vadd.f32 %v233, %v292
    %v363 = vadd.f32 %v234, %v292
    %v364 = vadd.f32 %v235, %v292
    %v365 = vadd.f32 %v236, %v292
    %v366 = vadd.f32 %v237, %v292
    %v367 = vadd.f32 %v238, %v292
    %v368 = vadd.f32 %v239, %v292
    %v369 = vadd.f32 %v240, %v292
    %v370 = vadd.f32 %v241, %v292
    %v371 = vadd.f32 %v242, %v292
    %v372 = vadd.f32 %v243, %v292
    %v373 = vadd.f32 %v244, %v292
    %v374 = vadd.f32 %v245, %v292
    %v375 = vadd.f32 %v246, %v292
    %v376 = vadd.f32 %v247, %v292
    %v377 = vadd.f32 %v248, %v292
    %v378 = vadd.f32 %v249, %v292
    %v379 = vadd.f32 %v250, %v292
    %v380 = vadd.f32 %v251, %v292
    %v381 = vadd.f32 %v252, %v292
    %v382 = vadd.f32 %v253, %v292
    %v383 = vadd.f32 %v254, %v292
    %v384 = vadd.f32 %v255, %v292
    %v385 = vadd.f32 %v256, %v292
    %v386 = vadd.f32 %v257, %v292
    %v387 = vadd.f32 %v258, %v292
    %v388 = vadd.f32 %v259, %v292
    %v389 = vadd.f32 %v260, %v292
    %v390 = vadd.f32 %v261, %v292
    %v391 = vadd.f32 %v262, %v292
    %v392 = vadd.f32 %v263, %v292
    %v393 = vadd.f32 %v264, %v292
    %v394 = vadd.f32 %v265, %v292
    %v395 = vadd.f32 %v266, %v292
    %v396 = vadd.f32 %v267, %v292
    %v397 = vadd.f32 %v268, %v292
    %v398 = vadd.f32 %v269, %v292
    %v399 = vadd.f32 %v270, %v292
    %v400 = vadd.f32 %v271, %v292
    %v401 = vadd.f32 %v272, %v292
    %v402 = vadd.f32 %v273, %v292
    %v403 = vadd.f32 %v274, %v292
    %v404 = vadd.f32 %v275, %v292
    %v405 = vadd.f32 %v276, %v292
    %v406 = vadd.f32 %v277, %v292
    %v407 = vadd.f32 %v278, %v292
    %v408 = vadd.f32 %v279, %v292
    %v409 = vadd.f32 %v280, %v292
    %v410 = vadd.f32 %v281, %v292
    %v411 = vadd.f32 %v282, %v292
    %v412 = vadd.f32 %v283, %v292
    %v413 = vadd.f32 %v284, %v292
    %v414 = vadd.f32 %v285, %v292
    %v415 = vadd.f32 %v286, %v292
    %v416 = vadd.f32 %v287, %v292
    %v417 = vadd.f32 %v288, %v292
    %v418 = vadd.f32 %v289, %v292
    %v419 = vadd.f32 %v290, %v292
    %v420 = vadd.f32 %v291, %v292
    %421 = vst [vmem:[#allocation7] sm:$0xff] %v293
    %422 = vst [vmem:[#allocation7 + $0x8] sm:$0xff] %v294
    %423 = vst [vmem:[#allocation7 + $0x10] sm:$0xff] %v295
    %424 = vst [vmem:[#allocation7 + $0x18] sm:$0xff] %v296
    %425 = vst [vmem:[#allocation7 + $0x20] sm:$0xff] %v297
    %426 = vst [vmem:[#allocation7 + $0x28] sm:$0xff] %v298
    %427 = vst [vmem:[#allocation7 + $0x30] sm:$0xff] %v299
    %428 = vst [vmem:[#allocation7 + $0x38] sm:$0xff] %v300
    %429 = vst [vmem:[#allocation7 + $0x40] sm:$0xff] %v301
    %430 = vst [vmem:[#allocation7 + $0x48] sm:$0xff] %v302
    %431 = vst [vmem:[#allocation7 + $0x50] sm:$0xff] %v303
    %432 = vst [vmem:[#allocation7 + $0x58] sm:$0xff] %v304
    %433 = vst [vmem:[#allocation7 + $0x60] sm:$0xff] %v305
    %434 = vst [vmem:[#allocation7 + $0x68] sm:$0xff] %v306
    %435 = vst [vmem:[#allocation7 + $0x70] sm:$0xff] %v307
    %436 = vst [vmem:[#allocation7 + $0x78] sm:$0xff] %v308
    %437 = vst [vmem:[#allocation7 + $0x80] sm:$0xff] %v309
    %438 = vst [vmem:[#allocation7 + $0x88] sm:$0xff] %v310
    %439 = vst [vmem:[#allocation7 + $0x90] sm:$0xff] %v311
    %440 = vst [vmem:[#allocation7 + $0x98] sm:$0xff] %v312
    %441 = vst [vmem:[#allocation7 + $0xa0] sm:$0xff] %v313
    %442 = vst [vmem:[#allocation7 + $0xa8] sm:$0xff] %v314
    %443 = vst [vmem:[#allocation7 + $0xb0] sm:$0xff] %v315
    %444 = vst [vmem:[#allocation7 + $0xb8] sm:$0xff] %v316
    %445 = vst [vmem:[#allocation7 + $0xc0] sm:$0xff] %v317
    %446 = vst [vmem:[#allocation7 + $0xc8] sm:$0xff] %v318
    %447 = vst [vmem:[#allocation7 + $0xd0] sm:$0xff] %v319
    %448 = vst [vmem:[#allocation7 + $0xd8] sm:$0xff] %v320
    %449 = vst [vmem:[#allocation7 + $0xe0] sm:$0xff] %v321
    %450 = vst [vmem:[#allocation7 + $0xe8] sm:$0xff] %v322
    %451 = vst [vmem:[#allocation7 + $0xf0] sm:$0xff] %v323
    %452 = vst [vmem:[#allocation7 + $0xf8] sm:$0xff] %v324
    %453 = vst [vmem:[#allocation7 + $0x100] sm:$0xff] %v325
    %454 = vst [vmem:[#allocation7 + $0x108] sm:$0xff] %v326
    %455 = vst [vmem:[#allocation7 + $0x110] sm:$0xff] %v327
    %456 = vst [vmem:[#allocation7 + $0x118] sm:$0xff] %v328
    %457 = vst [vmem:[#allocation7 + $0x120] sm:$0xff] %v329
    %458 = vst [vmem:[#allocation7 + $0x128] sm:$0xff] %v330
    %459 = vst [vmem:[#allocation7 + $0x130] sm:$0xff] %v331
    %460 = vst [vmem:[#allocation7 + $0x138] sm:$0xff] %v332
    %461 = vst [vmem:[#allocation7 + $0x140] sm:$0xff] %v333
    %462 = vst [vmem:[#allocation7 + $0x148] sm:$0xff] %v334
    %463 = vst [vmem:[#allocation7 + $0x150] sm:$0xff] %v335
    %464 = vst [vmem:[#allocation7 + $0x158] sm:$0xff] %v336
    %465 = vst [vmem:[#allocation7 + $0x160] sm:$0xff] %v337
    %466 = vst [vmem:[#allocation7 + $0x168] sm:$0xff] %v338
    %467 = vst [vmem:[#allocation7 + $0x170] sm:$0xff] %v339
    %468 = vst [vmem:[#allocation7 + $0x178] sm:$0xff] %v340
    %469 = vst [vmem:[#allocation7 + $0x180] sm:$0xff] %v341
    %470 = vst [vmem:[#allocation7 + $0x188] sm:$0xff] %v342
    %471 = vst [vmem:[#allocation7 + $0x190] sm:$0xff] %v343
    %472 = vst [vmem:[#allocation7 + $0x198] sm:$0xff] %v344
    %473 = vst [vmem:[#allocation7 + $0x1a0] sm:$0xff] %v345
    %474 = vst [vmem:[#allocation7 + $0x1a8] sm:$0xff] %v346
    %475 = vst [vmem:[#allocation7 + $0x1b0] sm:$0xff] %v347
    %476 = vst [vmem:[#allocation7 + $0x1b8] sm:$0xff] %v348
    %477 = vst [vmem:[#allocation7 + $0x1c0] sm:$0xff] %v349
    %478 = vst [vmem:[#allocation7 + $0x1c8] sm:$0xff] %v350
    %479 = vst [vmem:[#allocation7 + $0x1d0] sm:$0xff] %v351
    %480 = vst [vmem:[#allocation7 + $0x1d8] sm:$0xff] %v352
    %481 = vst [vmem:[#allocation7 + $0x1e0] sm:$0xff] %v353
    %482 = vst [vmem:[#allocation7 + $0x1e8] sm:$0xff] %v354
    %483 = vst [vmem:[#allocation7 + $0x1f0] sm:$0xff] %v355
    %484 = vst [vmem:[#allocation7 + $0x1f8] sm:$0xff] %v356
    %485 = vst [vmem:[#allocation7 + $0x200] sm:$0xff] %v357
    %486 = vst [vmem:[#allocation7 + $0x208] sm:$0xff] %v358
    %487 = vst [vmem:[#allocation7 + $0x210] sm:$0xff] %v359
    %488 = vst [vmem:[#allocation7 + $0x218] sm:$0xff] %v360
    %489 = vst [vmem:[#allocation7 + $0x220] sm:$0xff] %v361
    %490 = vst [vmem:[#allocation7 + $0x228] sm:$0xff] %v362
    %491 = vst [vmem:[#allocation7 + $0x230] sm:$0xff] %v363
    %492 = vst [vmem:[#allocation7 + $0x238] sm:$0xff] %v364
    %493 = vst [vmem:[#allocation7 + $0x240] sm:$0xff] %v365
    %494 = vst [vmem:[#allocation7 + $0x248] sm:$0xff] %v366
    %495 = vst [vmem:[#allocation7 + $0x250] sm:$0xff] %v367
    %496 = vst [vmem:[#allocation7 + $0x258] sm:$0xff] %v368
    %497 = vst [vmem:[#allocation7 + $0x260] sm:$0xff] %v369
    %498 = vst [vmem:[#allocation7 + $0x268] sm:$0xff] %v370
    %499 = vst [vmem:[#allocation7 + $0x270] sm:$0xff] %v371
    %500 = vst [vmem:[#allocation7 + $0x278] sm:$0xff] %v372
    %501 = vst [vmem:[#allocation7 + $0x280] sm:$0xff] %v373
    %502 = vst [vmem:[#allocation7 + $0x288] sm:$0xff] %v374
    %503 = vst [vmem:[#allocation7 + $0x290] sm:$0xff] %v375
    %504 = vst [vmem:[#allocation7 + $0x298] sm:$0xff] %v376
    %505 = vst [vmem:[#allocation7 + $0x2a0] sm:$0xff] %v377
    %506 = vst [vmem:[#allocation7 + $0x2a8] sm:$0xff] %v378
    %507 = vst [vmem:[#allocation7 + $0x2b0] sm:$0xff] %v379
    %508 = vst [vmem:[#allocation7 + $0x2b8] sm:$0xff] %v380
    %509 = vst [vmem:[#allocation7 + $0x2c0] sm:$0xff] %v381
    %510 = vst [vmem:[#allocation7 + $0x2c8] sm:$0xff] %v382
    %511 = vst [vmem:[#allocation7 + $0x2d0] sm:$0xff] %v383
    %512 = vst [vmem:[#allocation7 + $0x2d8] sm:$0xff] %v384
    %513 = vst [vmem:[#allocation7 + $0x2e0] sm:$0xff] %v385
    %514 = vst [vmem:[#allocation7 + $0x2e8] sm:$0xff] %v386
    %515 = vst [vmem:[#allocation7 + $0x2f0] sm:$0xff] %v387
    %516 = vst [vmem:[#allocation7 + $0x2f8] sm:$0xff] %v388
    %517 = vst [vmem:[#allocation7 + $0x300] sm:$0xff] %v389
    %518 = vst [vmem:[#allocation7 + $0x308] sm:$0xff] %v390
    %519 = vst [vmem:[#allocation7 + $0x310] sm:$0xff] %v391
    %520 = vst [vmem:[#allocation7 + $0x318] sm:$0xff] %v392
    %521 = vst [vmem:[#allocation7 + $0x320] sm:$0xff] %v393
    %522 = vst [vmem:[#allocation7 + $0x328] sm:$0xff] %v394
    %523 = vst [vmem:[#allocation7 + $0x330] sm:$0xff] %v395
    %524 = vst [vmem:[#allocation7 + $0x338] sm:$0xff] %v396
    %525 = vst [vmem:[#allocation7 + $0x340] sm:$0xff] %v397
    %526 = vst [vmem:[#allocation7 + $0x348] sm:$0xff] %v398
    %527 = vst [vmem:[#allocation7 + $0x350] sm:$0xff] %v399
    %528 = vst [vmem:[#allocation7 + $0x358] sm:$0xff] %v400
    %529 = vst [vmem:[#allocation7 + $0x360] sm:$0xff] %v401
    %530 = vst [vmem:[#allocation7 + $0x368] sm:$0xff] %v402
    %531 = vst [vmem:[#allocation7 + $0x370] sm:$0xff] %v403
    %532 = vst [vmem:[#allocation7 + $0x378] sm:$0xff] %v404
    %533 = vst [vmem:[#allocation7 + $0x380] sm:$0xff] %v405
    %534 = vst [vmem:[#allocation7 + $0x388] sm:$0xff] %v406
    %535 = vst [vmem:[#allocation7 + $0x390] sm:$0xff] %v407
    %536 = vst [vmem:[#allocation7 + $0x398] sm:$0xff] %v408
    %537 = vst [vmem:[#allocation7 + $0x3a0] sm:$0xff] %v409
    %538 = vst [vmem:[#allocation7 + $0x3a8] sm:$0xff] %v410
    %539 = vst [vmem:[#allocation7 + $0x3b0] sm:$0xff] %v411
    %540 = vst [vmem:[#allocation7 + $0x3b8] sm:$0xff] %v412
    %541 = vst [vmem:[#allocation7 + $0x3c0] sm:$0xff] %v413
    %542 = vst [vmem:[#allocation7 + $0x3c8] sm:$0xff] %v414
    %543 = vst [vmem:[#allocation7 + $0x3d0] sm:$0xff] %v415
    %544 = vst [vmem:[#allocation7 + $0x3d8] sm:$0xff] %v416
    %545 = vst [vmem:[#allocation7 + $0x3e0] sm:$0xff] %v417
    %546 = vst [vmem:[#allocation7 + $0x3e8] sm:$0xff] %v418
    %547 = vst [vmem:[#allocation7 + $0x3f0] sm:$0xff] %v419
    %548 = vst [vmem:[#allocation7 + $0x3f8] sm:$0xff] %v420
    // Predicated region
    $region18: #{tpu_custom_call.1} parent=1 // pred_check
      _
    $region19: #{tpu_custom_call.1} parent=1 // pred_check_branch
      %550 = sbr.rel (0) target = $region21
    $region20: #{tpu_custom_call.1} parent=1 // pred_region
      %552 = vsyncadd [#allocation6], 0
      %s553 = sshll.u32 [#allocation7], 4
      %s554 = int_to_ptr.vmem [resolvable:$true] %s553
      %s555 = sshll.u32 %s3, 4
      %s556 = int_to_ptr.hbm [resolvable:$true] %s555
      %561 = dma.vmem_to_hbm [thread:$0]  %s554, 16384, %s556, [#allocation6], 512, 512, 32
    $region21: #{tpu_custom_call.1} parent=1 // pred_fallthru
      _
    // Predicated region
    $region22: #{tpu_custom_call.1} parent=1 // pred_check
      _
    $region23: #{tpu_custom_call.1} parent=1 // pred_check_branch
      %563 = sbr.rel (0) target = $region25
    $region24: #{tpu_custom_call.1} parent=1 // pred_region
      %565 = dma.done [#allocation6], 16384
    $region25: #{tpu_custom_call.1} parent=1 // pred_fallthru
      _
    %566 = vsyncpa [#allocation5], 1
    %567 = vsyncpa [#allocation6], 1

</llo_original>
